<compile_context>
chip_gen: v7x
topology: tpu7x:2x2x1
jax: 0.10.0
libtpu: 0.0.40
codegen_flags: <defaults>
</compile_context>

<pallas_src>
import jax
import jax.numpy as jnp
from jax.experimental import pallas as pl
from jax.experimental.pallas import tpu as pltpu


def _fused_kernel(x_ref, w_ref, shift_ref, o_ref):
    # x_ref:     (TM, C1)              pixels for this tile (TM = tile_nh * W), bf16
    # w_ref:     (1, C1, KKp)          BN-scale-folded weight slice for this di, bf16
    # shift_ref: (1, KKp)              folded BN shift, f32
    # o_ref:     (tile_nh, 1, W, KKp)  NHWC-ordered output tile
    acc = jnp.dot(x_ref[...], w_ref[0], preferred_element_type=jnp.float32)
    y = acc + shift_ref[...]
    # SiLU = y * sigmoid(y); reciprocal on the EUP slot instead of a VALU divide.
    y = y * pl.reciprocal(1.0 + jnp.exp(-y), approx=True)
    # Layout-preserving reshape (W % 8 == 0, KKp % 128 == 0): no data movement.
    o_ref[...] = y.astype(o_ref.dtype).reshape(o_ref.shape)


def _choose_tile(NH, W, C1, KKp, in_bytes, out_bytes, target_pixels):
    """Largest rows-per-step whose double-buffered footprint fits a VMEM budget."""
    tile_nh = max(1, min(NH, max(1, target_pixels // W)))

    def footprint(t):
        m = t * W
        return (2 * m * C1 * in_bytes        # x tile, double buffered
                + 2 * C1 * KKp * in_bytes    # weight slice, double buffered
                + 2 * KKp * 4                # shift
                + 2 * m * KKp * out_bytes    # output tile, double buffered
                + m * KKp * 4)               # f32 accumulator / epilogue temps

    budget = 28 << 20                         # also safe for v7x's 64 MiB VMEM
    while tile_nh > 1 and footprint(tile_nh) > budget:
        tile_nh //= 2

    fp = footprint(tile_nh)
    # Default scoped VMEM is 16 MiB (v5e) / 32 MiB (v6e/v7x): raise only if needed.
    vmem_limit = (48 << 20) if fp > (12 << 20) else None
    return tile_nh, vmem_limit


def conv_transpose_bn_silu(x_nchw, weight, gamma, beta, run_mean, run_var, *,
                           k=2, s=2, eps=1e-5,
                           compute_dtype=jnp.bfloat16,
                           out_layout="NCHW",
                           target_pixels=2048):
    """x_nchw: (N, C1, H, W); weight: (C1, C2, k, k) (PyTorch ConvTranspose2d layout)."""
    assert k == s, "kernel assumes k == s, p == 0 (no overlapping contributions)"
    N, C1, H, W = x_nchw.shape
    _, C2, _, _ = weight.shape
    assert W % 8 == 0, "W must be a multiple of 8 for the layout-preserving in-kernel reshape"

    out_dtype = x_nchw.dtype
    KC = k * C2                                   # (dj, c2) columns per di
    KKp = max(128, ((KC + 127) // 128) * 128)     # lane-dense (multiple of 128)

    # --- fold BN (eval mode) into weight / shift --------------------------------
    bn_scale = gamma / jnp.sqrt(run_var + eps)    # (C2,)
    bn_shift = beta - run_mean * bn_scale         # (C2,)

    # weight (C1, C2, kH, kW) -> (kH=di, C1, kW=dj, C2); fold scale over c2.
    w4 = jnp.transpose(weight, (2, 0, 3, 1)) * bn_scale[None, None, None, :]
    w3 = w4.reshape(k, C1, KC)
    w3 = jnp.pad(w3, ((0, 0), (0, 0), (0, KKp - KC))).astype(compute_dtype)

    shift = jnp.pad(jnp.tile(bn_shift, k), (0, KKp - KC)).astype(jnp.float32)
    shift = shift.reshape(1, KKp)

    # --- input glue: NCHW -> (N*H, W, C1) pixel rows -----------------------------
    x3 = jnp.transpose(x_nchw, (0, 2, 3, 1)).reshape(N * H, W, C1)

    NH = N * H
    in_bytes = jnp.dtype(compute_dtype).itemsize
    out_bytes = jnp.dtype(out_dtype).itemsize
    tile_nh, vmem_limit = _choose_tile(NH, W, C1, KKp, in_bytes, out_bytes,
                                       target_pixels)
    NHp = ((NH + tile_nh - 1) // tile_nh) * tile_nh
    if NHp != NH:
        # Padded rows produce SiLU(shift) garbage; they are trimmed before reshape.
        x3 = jnp.pad(x3, ((0, NHp - NH), (0, 0), (0, 0)))
    x2 = x3.reshape(NHp * W, C1).astype(compute_dtype)

    TM = tile_nh * W
    grid = (NHp // tile_nh, k)                    # both axes independent

    cost = pl.CostEstimate(
        flops=2 * NHp * W * C1 * KKp * k,
        transcendentals=NHp * W * KKp * k,
        bytes_accessed=(x2.size * in_bytes
                        + w3.size * in_bytes
                        + shift.size * 4
                        + NHp * k * W * KKp * out_bytes),
    )

    out4 = pl.pallas_call(
        _fused_kernel,
        out_shape=jax.ShapeDtypeStruct((NHp, k, W, KKp), out_dtype),
        grid_spec=pltpu.PrefetchScalarGridSpec(
            num_scalar_prefetch=0,
            grid=grid,
            in_specs=[
                pl.BlockSpec((TM, C1), lambda i, d: (i, 0)),        # pixels
                pl.BlockSpec((1, C1, KKp), lambda i, d: (d, 0, 0)),  # weight[di]
                pl.BlockSpec((1, KKp), lambda i, d: (0, 0)),         # BN shift
            ],
            out_specs=pl.BlockSpec((tile_nh, 1, W, KKp),
                                   lambda i, d: (i, d, 0, 0)),
        ),
        compiler_params=pltpu.CompilerParams(
            dimension_semantics=("parallel", "parallel"),
            vmem_limit_bytes=vmem_limit),
        cost_estimate=cost,
    )(x2, w3, shift)

    # --- output glue: already NHWC-ordered; trim padding and reshape -------------
    # (no-op slices when NH % tile_nh == 0 and k*C2 is already a multiple of 128)
    out4 = out4[:NH, :, :, :KC]                        # (N*H, k, W, k*C2)
    out_nhwc = out4.reshape(N, H * k, W * k, C2)       # pure reshape, no transpose
    if out_layout == "NHWC":
        return out_nhwc
    # PyTorch parity. Downstream TPU consumers should request out_layout="NHWC"
    # to skip this full-output transpose entirely.
    return jnp.transpose(out_nhwc, (0, 3, 1, 2))


def _reference(x_nchw, weight, gamma, beta, run_mean, run_var, *, k=2, eps=1e-5):
    """Pure-JAX reference matching PyTorch ConvTranspose2d(k=s, p=0) + BN(eval) + SiLU."""
    N, C1, H, W = x_nchw.shape
    _, C2, _, _ = weight.shape
    out = jnp.zeros((N, C2, H * k, W * k), jnp.float32)
    for di in range(k):
        for dj in range(k):
            contrib = jnp.einsum("nchw,cd->ndhw", x_nchw, weight[:, :, di, dj])
            out = out.at[:, :, di::k, dj::k].set(contrib)
    scale = gamma / jnp.sqrt(run_var + eps)
    shift = beta - run_mean * scale
    y = out * scale[None, :, None, None] + shift[None, :, None, None]
    return y * jax.nn.sigmoid(y)


if __name__ == "__main__":
    key = jax.random.PRNGKey(0)
    k_x, k_w, k_g, k_b, k_m, k_v = jax.random.split(key, 6)

    N, C1, C2, H, W, K, S = 2, 4, 8, 16, 16, 2, 2

    x = jax.random.normal(k_x, (N, C1, H, W), dtype=jnp.float32)
    # PyTorch ConvTranspose2d weight shape: (in_channels, out_channels, kH, kW)
    weight = 0.1 * jax.random.normal(k_w, (C1, C2, K, K), dtype=jnp.float32)
    gamma = 1.0 + 0.1 * jax.random.normal(k_g, (C2,), dtype=jnp.float32)
    beta = 0.1 * jax.random.normal(k_b, (C2,), dtype=jnp.float32)
    run_mean = 0.1 * jax.random.normal(k_m, (C2,), dtype=jnp.float32)
    run_var = jnp.abs(1.0 + 0.1 * jax.random.normal(k_v, (C2,), dtype=jnp.float32))

    out = conv_transpose_bn_silu(x, weight, gamma, beta, run_mean, run_var,
                                 k=K, s=S)
    out = jax.block_until_ready(out)

    ref = _reference(x, weight, gamma, beta, run_mean, run_var, k=K)
    assert out.shape == (N, C2, H * S, W * S), out.shape
    max_err = float(jnp.max(jnp.abs(out.astype(jnp.float32) - ref)))
    # bf16 compute + approx EUP reciprocal -> loose tolerance vs f32 reference.
    assert jnp.allclose(out.astype(jnp.float32), ref, atol=5e-2, rtol=5e-2), \
        f"mismatch vs reference, max abs err {max_err}"

    print("KERNEL_OK")
</pallas_src>

<mosaic_0001>
module attributes {stable_mosaic.version = 11 : i64} {
  func.func @_fused_kernel(%arg0: i32, %arg1: i32, %arg2: memref<512x4xbf16, #tpu.memory_space<vmem>>, %arg3: memref<1x4x128xbf16, #tpu.memory_space<vmem>>, %arg4: memref<1x128xf32, #tpu.memory_space<vmem>>, %arg5: memref<32x1x16x128xf32, #tpu.memory_space<vmem>>) attributes {dimension_semantics = [#tpu.dimension_semantics<parallel>, #tpu.dimension_semantics<parallel>], iteration_bounds = array<i64: 1, 2>, scalar_prefetch = 0 : i64, scratch_operands = 0 : i64, tpu.core_type = #tpu.core_type<tc>, window_params = [{transform_indices = @transform_0, window_bounds = array<i64: 512, 4>}, {transform_indices = @transform_1, window_bounds = array<i64: 1, 4, 128>}, {pipeline_mode = #tpu.pipeline_mode<synchronous>, transform_indices = @transform_2, window_bounds = array<i64: 1, 128>}, {transform_indices = @transform_3, window_bounds = array<i64: 32, 1, 16, 128>}]} {
    %c0 = arith.constant 0 : index
    %c0_0 = arith.constant 0 : index
    %0 = vector.load %arg2[%c0, %c0_0] : memref<512x4xbf16, #tpu.memory_space<vmem>>, vector<512x4xbf16>
    %c0_1 = arith.constant 0 : index
    %c0_2 = arith.constant 0 : index
    %c0_3 = arith.constant 0 : index
    %1 = vector.load %arg3[%c0_1, %c0_2, %c0_3] : memref<1x4x128xbf16, #tpu.memory_space<vmem>>, vector<1x4x128xbf16>
    %2 = vector.shape_cast %1 : vector<1x4x128xbf16> to vector<4x128xbf16>
    %cst = arith.constant dense<0.000000e+00> : vector<512x128xf32>
    %3 = tpu.matmul %0, %2, %cst {dimension_numbers = #tpu.dot_dimension_numbers<[1], [0], [0], [1], [0, 0, 1, 1], [], []>} : vector<512x4xbf16>, vector<4x128xbf16>, vector<512x128xf32> -> vector<512x128xf32>
    %c0_4 = arith.constant 0 : index
    %c0_5 = arith.constant 0 : index
    %4 = vector.load %arg4[%c0_4, %c0_5] : memref<1x128xf32, #tpu.memory_space<vmem>>, vector<1x128xf32>
    %5 = vector.broadcast %4 : vector<1x128xf32> to vector<512x128xf32>
    %6 = arith.addf %3, %5 : vector<512x128xf32>
    %cst_6 = arith.constant 0.000000e+00 : f32
    %7 = vector.broadcast %cst_6 : f32 to vector<512x128xf32>
    %8 = arith.subf %7, %6 : vector<512x128xf32>
    %9 = math.exp %8 : vector<512x128xf32>
    %cst_7 = arith.constant 1.000000e+00 : f32
    %10 = vector.broadcast %cst_7 : f32 to vector<512x128xf32>
    %11 = arith.addf %10, %9 : vector<512x128xf32>
    %12 = tpu.reciprocal %11 {approx = true} : vector<512x128xf32> -> vector<512x128xf32>
    %13 = arith.mulf %6, %12 : vector<512x128xf32>
    %14 = vector.shape_cast %13 : vector<512x128xf32> to vector<32x1x16x128xf32>
    %c0_8 = arith.constant 0 : index
    %c0_9 = arith.constant 0 : index
    %c0_10 = arith.constant 0 : index
    %c0_11 = arith.constant 0 : index
    %15 = vector.load %arg5[%c0_8, %c0_9, %c0_10, %c0_11] : memref<32x1x16x128xf32, #tpu.memory_space<vmem>>, vector<32x1x16x128xf32>
    tpu.vector_store %arg5[%c0_8, %c0_9, %c0_10, %c0_11], %14 {strides = array<i32>} : memref<32x1x16x128xf32, #tpu.memory_space<vmem>>, vector<32x1x16x128xf32>,
    return
  }
  func.func @transform_0(%arg0: i32, %arg1: i32) -> (i32, i32) {
    %c0_i32 = arith.constant 0 : i32
    %c0_i32_0 = arith.constant 0 : i32
    return %arg0, %c0_i32 : i32, i32
  }
  func.func @transform_1(%arg0: i32, %arg1: i32) -> (i32, i32, i32) {
    %c0_i32 = arith.constant 0 : i32
    %c0_i32_0 = arith.constant 0 : i32
    %c0_i32_1 = arith.constant 0 : i32
    return %arg1, %c0_i32, %c0_i32_0 : i32, i32, i32
  }
  func.func @transform_2(%arg0: i32, %arg1: i32) -> (i32, i32) {
    %c0_i32 = arith.constant 0 : i32
    %c0_i32_0 = arith.constant 0 : i32
    %c0_i32_1 = arith.constant 0 : i32
    return %c0_i32, %c0_i32_0 : i32, i32
  }
  func.func @transform_3(%arg0: i32, %arg1: i32) -> (i32, i32, i32, i32) {
    %c0_i32 = arith.constant 0 : i32
    %c0_i32_0 = arith.constant 0 : i32
    %c0_i32_1 = arith.constant 0 : i32
    return %arg0, %arg1, %c0_i32, %c0_i32_0 : i32, i32, i32, i32
  }
}

</mosaic_0001>

<llo_original>
// kernel: tpu_custom_call.1
$region0: #{tpu_custom_call.1}
  #allocation0 [shape = 'u32[]', space=smem, size = 0x4, offset = 0x4, fixed_abs, tag = 'smem constant byte address 0x4 - core index']
  #allocation1 [shape = 'u32[144,128]{1,0:T(1,128)}', space=vmem, size = 0x12000, scoped, tag = 'internal scratch']
  #allocation4 [shape = 's32[]', space=sflag, size = 0x4, offset = 0, fixed_abs, tag = 'sflag constant byte address 0x0 - dummy sync flag']
  %s0 = inlined_call_operand.vmem [shape: bf16[512,4], index: 0, kind: input, shape index: {}]
  %s1 = inlined_call_operand.vmem [shape: bf16[2,4,128], index: 1, kind: input, shape index: {}]
  %s2 = inlined_call_operand.vmem [shape: f32[1,128], index: 2, kind: input, shape index: {}]
  %s3 = inlined_call_operand.hbm [shape: f32[32,2,16,128], index: 3, kind: output, shape index: {}]
  %s4 = sld [smem:[#allocation0]]
  $region45: #{tpu_custom_call.1} parent=0
    _
  %s6 = ssub.s32 1, %s4
  %s7 = scalar_select 0, %s6, %s4
  $region1: #{tpu_custom_call.1} parent=0
    #allocation2 [shape = 'u8[524288]{0}', space=vmem, size = 0x80000, scoped, tag = 'output window, operand 0']
    #allocation3 [shape = 's32[2]{0}', space=sflag, size = 0x8, scoped, tag = 'scoped memory for tpu_custom_call.1']
    %8 = vsyncpa [#allocation3], 0
    %s9 = scalar_lea.sflag [#allocation3], 1
    %10 = vsyncpa %s9, 0
    loop: start=0, step=1, limit=4
    $region2: #{tpu_custom_call.1} parent=1 // loop_pre_header
      _
    $region3: #{tpu_custom_call.1} parent=1 // loop_header
      %s12 = sphi 0, %s16
      %p13 = scmp.ge.s32.totalorder %s12, 4
      %s19 = sphi 0, %s31
      %s20 = sphi 0, %s27
      %s21 = sphi 0, %s19
      %s22 = sphi 0, %s20
      %s23 = sphi 0, %s21
      %s24 = sphi 0, %s22
      %s34 = sphi 0, %s36
      %s37 = sphi 0, %s34
      %s38 = sphi 0, %s37
      %s54 = sphi 0, %s38
      %s60 = sphi 0, %s62
      %s63 = sphi 0, %s60
      %s64 = sphi 0, %s63
      %s80 = sphi 0, %s64
      %s84 = sphi 0, %s84
      %s86 = sphi 0, %s84
      %s87 = sphi 0, %s86
      %s101 = sphi 0, %s87
      %s109 = sphi 0, %s111
      %s112 = sphi 0, %s109
      %s113 = sphi 0, %s112
      %s129 = sphi 0, %s113
    $region4: #{tpu_custom_call.1} parent=1 // loop_header_branch
      %15 = sbr.rel (%p13) target = $region8
    $region5: #{tpu_custom_call.1} parent=1 // loop_body
      %s17 = ssub.s32 %s12, 1
      %s18 = ssub.s32 %s12, 2
      %s25 = sadd.s32 1, %s20
      %p26 = scmp.ge.s32.totalorder %s25, 2
      %s27 = scalar_select %p26, 0, %s25
      %s28 = sadd.s32 1, %s19
      %s29 = scalar_select %p26, %s28, %s19
      %p30 = scmp.ge.s32.totalorder %s29, 1
      %s31 = scalar_select %p30, 0, %s29
      %s32 = ssub.s32 %s19, %s31
      %p33 = scmp.eq.s32.totalorder %s32, 0
      %s35 = sadd.s32 %s34, 1
      %s36 = scalar_select %p33, %s34, %s35
      %p39 = pneg %p33
      %p40 = scmp.eq.s32.totalorder %s12, 1
      %p41 = por %p39, %p40
      %p42 = scmp.ne.s32.totalorder %s34, %s37
      %p43 = scmp.eq.s32.totalorder %s12, 0
      %p44 = por %p42, %p43
      %p45 = scmp.ne.s32.totalorder %s34, %s37
      %p46 = scmp.eq.s32.totalorder %s17, 1
      %p47 = por %p45, %p46
      %p48 = scmp.ne.s32.totalorder %s37, %s38
      %p49 = scmp.eq.s32.totalorder %s17, 0
      %p50 = por %p48, %p49
      %p51 = scmp.ne.s32.totalorder %s37, %s38
      %p52 = scmp.eq.s32.totalorder %s18, 1
      %p53 = por %p51, %p52
      %p55 = scmp.ne.s32.totalorder %s38, %s54
      %p56 = scmp.eq.s32.totalorder %s18, 0
      %p57 = por %p55, %p56
      %s58 = ssub.s32 %s20, %s27
      %p59 = scmp.eq.s32.totalorder %s58, 0
      %s61 = sadd.s32 %s60, 1
      %s62 = scalar_select %p59, %s60, %s61
      %p65 = pneg %p59
      %p66 = scmp.eq.s32.totalorder %s12, 1
      %p67 = por %p65, %p66
      %p68 = scmp.ne.s32.totalorder %s60, %s63
      %p69 = scmp.eq.s32.totalorder %s12, 0
      %p70 = por %p68, %p69
      %p71 = scmp.ne.s32.totalorder %s60, %s63
      %p72 = scmp.eq.s32.totalorder %s17, 1
      %p73 = por %p71, %p72
      %p74 = scmp.ne.s32.totalorder %s63, %s64
      %p75 = scmp.eq.s32.totalorder %s17, 0
      %p76 = por %p74, %p75
      %p77 = scmp.ne.s32.totalorder %s63, %s64
      %p78 = scmp.eq.s32.totalorder %s18, 1
      %p79 = por %p77, %p78
      %p81 = scmp.ne.s32.totalorder %s64, %s80
      %p82 = scmp.eq.s32.totalorder %s18, 0
      %p83 = por %p81, %p82
      %s85 = sadd.s32 %s84, 1
      %p88 = scmp.eq.s32.totalorder %s12, 1
      %p89 = scmp.ne.s32.totalorder %s84, %s86
      %p90 = scmp.eq.s32.totalorder %s12, 0
      %p91 = por %p89, %p90
      %p92 = scmp.ne.s32.totalorder %s84, %s86
      %p93 = scmp.eq.s32.totalorder %s17, 1
      %p94 = por %p92, %p93
      %p95 = scmp.ne.s32.totalorder %s86, %s87
      %p96 = scmp.eq.s32.totalorder %s17, 0
      %p97 = por %p95, %p96
      %p98 = scmp.ne.s32.totalorder %s86, %s87
      %p99 = scmp.eq.s32.totalorder %s18, 1
      %p100 = por %p98, %p99
      %p102 = scmp.ne.s32.totalorder %s87, %s101
      %p103 = scmp.eq.s32.totalorder %s18, 0
      %p104 = por %p102, %p103
      %s105 = ssub.s32 %s19, %s31
      %s106 = ssub.s32 %s20, %s27
      %s107 = sor.u32 %s105, %s106
      %p108 = scmp.eq.s32.totalorder %s107, 0
      %s110 = sadd.s32 %s109, 1
      %s111 = scalar_select %p108, %s109, %s110
      %p114 = pneg %p108
      %p115 = scmp.eq.s32.totalorder %s12, 1
      %p116 = por %p114, %p115
      %p117 = scmp.ne.s32.totalorder %s109, %s112
      %p118 = scmp.eq.s32.totalorder %s12, 0
      %p119 = por %p117, %p118
      %p120 = scmp.ne.s32.totalorder %s109, %s112
      %p121 = scmp.eq.s32.totalorder %s17, 1
      %p122 = por %p120, %p121
      %p123 = scmp.ne.s32.totalorder %s112, %s113
      %p124 = scmp.eq.s32.totalorder %s17, 0
      %p125 = por %p123, %p124
      %p126 = scmp.ne.s32.totalorder %s112, %s113
      %p127 = scmp.eq.s32.totalorder %s18, 1
      %p128 = por %p126, %p127
      %p130 = scmp.ne.s32.totalorder %s113, %s129
      %p131 = scmp.eq.s32.totalorder %s18, 0
      %p132 = por %p130, %p131
      %p133 = scmp.le.s32.totalorder 1, %s12
      %p134 = scmp.lt.s32.totalorder %s12, 3
      %p135 = pnand %p133, %p134
      %p136 = pneg %p135
      // Predicated region
      $region9: #{tpu_custom_call.1} parent=5 // pred_check
        _
      $region10: #{tpu_custom_call.1} parent=5 // pred_check_branch
        %138 = sbr.rel (%p135) target = $region12
      $region11: #{tpu_custom_call.1} parent=5 // pred_region
        %s139 = ssub.s32 %s12, 1
        // Predicated region
        $region13: #{tpu_custom_call.1} parent=11 // pred_check
          %p140 = pneg %p50
        $region14: #{tpu_custom_call.1} parent=11 // pred_check_branch
          %142 = sbr.rel (%p140) target = $region16
        $region15: #{tpu_custom_call.1} parent=11 // pred_region
          %s143 = smul.u32 64, %s21
          %p144 = scmp.lt.s32.totalorder %s143, 63
          %s145 = scalar_select %p144, %s143, 63
          %s146 = smul.addr %s145, 4
          %s147 = scalar_lea.vmem %s0, %s146
          %s148 = smul.u32 64, %s21
        $region16: #{tpu_custom_call.1} parent=11 // pred_fallthru
          _
        // Predicated region
        $region17: #{tpu_custom_call.1} parent=11 // pred_check
          %p149 = pneg %p97
        $region18: #{tpu_custom_call.1} parent=11 // pred_check_branch
          %151 = sbr.rel (%p149) target = $region20
        $region19: #{tpu_custom_call.1} parent=11 // pred_region
          _
        $region20: #{tpu_custom_call.1} parent=11 // pred_fallthru
          _
      $region12: #{tpu_custom_call.1} parent=5 // pred_fallthru
        _
      %p152 = scmp.lt.s32.totalorder %s12, 2
      // Predicated region
      $region21: #{tpu_custom_call.1} parent=5 // pred_check
        %p153 = pneg %p152
      $region22: #{tpu_custom_call.1} parent=5 // pred_check_branch
        %155 = sbr.rel (%p153) target = $region24
      $region23: #{tpu_custom_call.1} parent=5 // pred_region
        // Predicated region
        $region25: #{tpu_custom_call.1} parent=23 // pred_check
          %p156 = pneg %p70
        $region26: #{tpu_custom_call.1} parent=23 // pred_check_branch
          %158 = sbr.rel (%p156) target = $region28
        $region27: #{tpu_custom_call.1} parent=23 // pred_region
          %p159 = scmp.lt.s32.totalorder %s20, 1
          %s160 = scalar_select %p159, %s20, 1
          %s161 = smul.addr %s160, 2
          %s162 = scalar_lea.vmem %s1, %s161
        $region28: #{tpu_custom_call.1} parent=23 // pred_fallthru
          _
      $region24: #{tpu_custom_call.1} parent=5 // pred_fallthru
        _
      %p163 = scmp.le.s32.totalorder 1, %s12
      %p164 = scmp.lt.s32.totalorder %s12, 3
      %p165 = pnand %p163, %p164
      %p166 = pneg %p165
      // Predicated region
      $region29: #{tpu_custom_call.1} parent=5 // pred_check
        _
      $region30: #{tpu_custom_call.1} parent=5 // pred_check_branch
        %168 = sbr.rel (%p165) target = $region32
      $region31: #{tpu_custom_call.1} parent=5 // pred_region
        %s169 = ssub.s32 %s12, 1
        %s170 = smul.u32 64, %s21
        %p171 = scmp.lt.s32.totalorder %s170, 63
        %s172 = scalar_select %p171, %s170, 63
        %s173 = smul.addr %s172, 4
        %s174 = scalar_lea.vmem %s0, %s173
        %p175 = pneg %p50
        %p176 = pneg %p47
        %p177 = scmp.lt.s32.totalorder %s22, 1
        %s178 = scalar_select %p177, %s22, 1
        %s179 = smul.addr %s178, 2
        %s180 = scalar_lea.vmem %s1, %s179
        %p181 = pneg %p76
        %p182 = pneg %p73
        %p183 = pneg %p97
        %p184 = pneg %p94
        %p185 = pneg %p125
        %p186 = pneg %p122
        %s187 = sand.u32 %s112, 1
        %s188 = scalar_lea.sflag [#allocation3], %s187
        %s189 = sand.u32 %s112, 1
        %s190 = smul.addr %s189, 512
        %s191 = scalar_lea.vmem [#allocation2], %s190
        %s192 = smul.u32 64, %s21
        %p193 = scmp.lt.s32.totalorder %s192, 63
        %s194 = scalar_select %p193, %s192, 63
        %s195 = smul.addr %s194, 4
        %s196 = scalar_lea.vmem %s0, %s195
        %s197 = smul.u32 64, %s21
        %p198 = scmp.lt.s32.totalorder %s22, 1
        %s199 = scalar_select %p198, %s22, 1
        %s200 = smul.addr %s199, 2
        %s201 = scalar_lea.vmem %s1, %s200
        %s202 = smul.u32 32, %s21
        %v204 = vld [vmem:[%s196] sm:$0xf]
        %v205 = vld [vmem:[%s196 + $0x4] sm:$0xf]
        %v206 = vld [vmem:[%s196 + $0x8] sm:$0xf]
        %v207 = vld [vmem:[%s196 + $0xc] sm:$0xf]
        %v208 = vld [vmem:[%s196 + $0x10] sm:$0xf]
        %v209 = vld [vmem:[%s196 + $0x14] sm:$0xf]
        %v210 = vld [vmem:[%s196 + $0x18] sm:$0xf]
        %v211 = vld [vmem:[%s196 + $0x1c] sm:$0xf]
        %v212 = vld [vmem:[%s196 + $0x20] sm:$0xf]
        %v213 = vld [vmem:[%s196 + $0x24] sm:$0xf]
        %v214 = vld [vmem:[%s196 + $0x28] sm:$0xf]
        %v215 = vld [vmem:[%s196 + $0x2c] sm:$0xf]
        %v216 = vld [vmem:[%s196 + $0x30] sm:$0xf]
        %v217 = vld [vmem:[%s196 + $0x34] sm:$0xf]
        %v218 = vld [vmem:[%s196 + $0x38] sm:$0xf]
        %v219 = vld [vmem:[%s196 + $0x3c] sm:$0xf]
        %v220 = vld [vmem:[%s196 + $0x40] sm:$0xf]
        %v221 = vld [vmem:[%s196 + $0x44] sm:$0xf]
        %v222 = vld [vmem:[%s196 + $0x48] sm:$0xf]
        %v223 = vld [vmem:[%s196 + $0x4c] sm:$0xf]
        %v224 = vld [vmem:[%s196 + $0x50] sm:$0xf]
        %v225 = vld [vmem:[%s196 + $0x54] sm:$0xf]
        %v226 = vld [vmem:[%s196 + $0x58] sm:$0xf]
        %v227 = vld [vmem:[%s196 + $0x5c] sm:$0xf]
        %v228 = vld [vmem:[%s196 + $0x60] sm:$0xf]
        %v229 = vld [vmem:[%s196 + $0x64] sm:$0xf]
        %v230 = vld [vmem:[%s196 + $0x68] sm:$0xf]
        %v231 = vld [vmem:[%s196 + $0x6c] sm:$0xf]
        %v232 = vld [vmem:[%s196 + $0x70] sm:$0xf]
        %v233 = vld [vmem:[%s196 + $0x74] sm:$0xf]
        %v234 = vld [vmem:[%s196 + $0x78] sm:$0xf]
        %v235 = vld [vmem:[%s196 + $0x7c] sm:$0xf]
        %v236 = vld [vmem:[%s196 + $0x80] sm:$0xf]
        %v237 = vld [vmem:[%s196 + $0x84] sm:$0xf]
        %v238 = vld [vmem:[%s196 + $0x88] sm:$0xf]
        %v239 = vld [vmem:[%s196 + $0x8c] sm:$0xf]
        %v240 = vld [vmem:[%s196 + $0x90] sm:$0xf]
        %v241 = vld [vmem:[%s196 + $0x94] sm:$0xf]
        %v242 = vld [vmem:[%s196 + $0x98] sm:$0xf]
        %v243 = vld [vmem:[%s196 + $0x9c] sm:$0xf]
        %v244 = vld [vmem:[%s196 + $0xa0] sm:$0xf]
        %v245 = vld [vmem:[%s196 + $0xa4] sm:$0xf]
        %v246 = vld [vmem:[%s196 + $0xa8] sm:$0xf]
        %v247 = vld [vmem:[%s196 + $0xac] sm:$0xf]
        %v248 = vld [vmem:[%s196 + $0xb0] sm:$0xf]
        %v249 = vld [vmem:[%s196 + $0xb4] sm:$0xf]
        %v250 = vld [vmem:[%s196 + $0xb8] sm:$0xf]
        %v251 = vld [vmem:[%s196 + $0xbc] sm:$0xf]
        %v252 = vld [vmem:[%s196 + $0xc0] sm:$0xf]
        %v253 = vld [vmem:[%s196 + $0xc4] sm:$0xf]
        %v254 = vld [vmem:[%s196 + $0xc8] sm:$0xf]
        %v255 = vld [vmem:[%s196 + $0xcc] sm:$0xf]
        %v256 = vld [vmem:[%s196 + $0xd0] sm:$0xf]
        %v257 = vld [vmem:[%s196 + $0xd4] sm:$0xf]
        %v258 = vld [vmem:[%s196 + $0xd8] sm:$0xf]
        %v259 = vld [vmem:[%s196 + $0xdc] sm:$0xf]
        %v260 = vld [vmem:[%s196 + $0xe0] sm:$0xf]
        %v261 = vld [vmem:[%s196 + $0xe4] sm:$0xf]
        %v262 = vld [vmem:[%s196 + $0xe8] sm:$0xf]
        %v263 = vld [vmem:[%s196 + $0xec] sm:$0xf]
        %v264 = vld [vmem:[%s196 + $0xf0] sm:$0xf]
        %v265 = vld [vmem:[%s196 + $0xf4] sm:$0xf]
        %v266 = vld [vmem:[%s196 + $0xf8] sm:$0xf]
        %v267 = vld [vmem:[%s196 + $0xfc] sm:$0xf]
        %v268 = vld [vmem:[%s201] sm:$0x3]
        %v269 = vld [vmem:[%s2] sm:$0x1]
        %v271 = vlaneseq
        %v272 = vshrl.u32 %v271, 7
        %v273 = vsub.s32 0, %v272
        %v274 = vrot.slane %v269, %v273
        %v340 = vunpack.c.l.b16 %v204
        %v341 = vunpack.c.l.b16 %v205
        %v342 = vunpack.c.l.b16 %v206
        %v343 = vunpack.c.l.b16 %v207
        %v344 = vunpack.c.l.b16 %v208
        %v345 = vunpack.c.l.b16 %v209
        %v346 = vunpack.c.l.b16 %v210
        %v347 = vunpack.c.l.b16 %v211
        %v348 = vunpack.c.l.b16 %v212
        %v349 = vunpack.c.l.b16 %v213
        %v350 = vunpack.c.l.b16 %v214
        %v351 = vunpack.c.l.b16 %v215
        %v352 = vunpack.c.l.b16 %v216
        %v353 = vunpack.c.l.b16 %v217
        %v354 = vunpack.c.l.b16 %v218
        %v355 = vunpack.c.l.b16 %v219
        %v356 = vunpack.c.l.b16 %v220
        %v357 = vunpack.c.l.b16 %v221
        %v358 = vunpack.c.l.b16 %v222
        %v359 = vunpack.c.l.b16 %v223
        %v360 = vunpack.c.l.b16 %v224
        %v361 = vunpack.c.l.b16 %v225
        %v362 = vunpack.c.l.b16 %v226
        %v363 = vunpack.c.l.b16 %v227
        %v364 = vunpack.c.l.b16 %v228
        %v365 = vunpack.c.l.b16 %v229
        %v366 = vunpack.c.l.b16 %v230
        %v367 = vunpack.c.l.b16 %v231
        %v368 = vunpack.c.l.b16 %v232
        %v369 = vunpack.c.l.b16 %v233
        %v370 = vunpack.c.l.b16 %v234
        %v371 = vunpack.c.l.b16 %v235
        %v372 = vunpack.c.l.b16 %v236
        %v373 = vunpack.c.l.b16 %v237
        %v374 = vunpack.c.l.b16 %v238
        %v375 = vunpack.c.l.b16 %v239
        %v376 = vunpack.c.l.b16 %v240
        %v377 = vunpack.c.l.b16 %v241
        %v378 = vunpack.c.l.b16 %v242
        %v379 = vunpack.c.l.b16 %v243
        %v380 = vunpack.c.l.b16 %v244
        %v381 = vunpack.c.l.b16 %v245
        %v382 = vunpack.c.l.b16 %v246
        %v383 = vunpack.c.l.b16 %v247
        %v384 = vunpack.c.l.b16 %v248
        %v385 = vunpack.c.l.b16 %v249
        %v386 = vunpack.c.l.b16 %v250
        %v387 = vunpack.c.l.b16 %v251
        %v388 = vunpack.c.l.b16 %v252
        %v389 = vunpack.c.l.b16 %v253
        %v390 = vunpack.c.l.b16 %v254
        %v391 = vunpack.c.l.b16 %v255
        %v392 = vunpack.c.l.b16 %v256
        %v393 = vunpack.c.l.b16 %v257
        %v394 = vunpack.c.l.b16 %v258
        %v395 = vunpack.c.l.b16 %v259
        %v396 = vunpack.c.l.b16 %v260
        %v397 = vunpack.c.l.b16 %v261
        %v398 = vunpack.c.l.b16 %v262
        %v399 = vunpack.c.l.b16 %v263
        %v400 = vunpack.c.l.b16 %v264
        %v401 = vunpack.c.l.b16 %v265
        %v402 = vunpack.c.l.b16 %v266
        %v403 = vunpack.c.l.b16 %v267
        %v404 = vpack.c.b16 %v341, %v340
        %v405 = vpack.c.b16 %v343, %v342
        %v406 = vpack.c.b16 %v345, %v344
        %v407 = vpack.c.b16 %v347, %v346
        %v408 = vpack.c.b16 %v349, %v348
        %v409 = vpack.c.b16 %v351, %v350
        %v410 = vpack.c.b16 %v353, %v352
        %v411 = vpack.c.b16 %v355, %v354
        %v412 = vpack.c.b16 %v357, %v356
        %v413 = vpack.c.b16 %v359, %v358
        %v414 = vpack.c.b16 %v361, %v360
        %v415 = vpack.c.b16 %v363, %v362
        %v416 = vpack.c.b16 %v365, %v364
        %v417 = vpack.c.b16 %v367, %v366
        %v418 = vpack.c.b16 %v369, %v368
        %v419 = vpack.c.b16 %v371, %v370
        %v420 = vpack.c.b16 %v373, %v372
        %v421 = vpack.c.b16 %v375, %v374
        %v422 = vpack.c.b16 %v377, %v376
        %v423 = vpack.c.b16 %v379, %v378
        %v424 = vpack.c.b16 %v381, %v380
        %v425 = vpack.c.b16 %v383, %v382
        %v426 = vpack.c.b16 %v385, %v384
        %v427 = vpack.c.b16 %v387, %v386
        %v428 = vpack.c.b16 %v389, %v388
        %v429 = vpack.c.b16 %v391, %v390
        %v430 = vpack.c.b16 %v393, %v392
        %v431 = vpack.c.b16 %v395, %v394
        %v432 = vpack.c.b16 %v397, %v396
        %v433 = vpack.c.b16 %v399, %v398
        %v434 = vpack.c.b16 %v401, %v400
        %v435 = vpack.c.b16 %v403, %v402
        %vm436 = vcmask 31744
        %v438 = vsel %vm436, %v404, 0
        %v441 = vsel %vm436, %v405, 0
        %v444 = vsel %vm436, %v406, 0
        %v447 = vsel %vm436, %v407, 0
        %v450 = vsel %vm436, %v408, 0
        %v453 = vsel %vm436, %v409, 0
        %v456 = vsel %vm436, %v410, 0
        %v459 = vsel %vm436, %v411, 0
        %v462 = vsel %vm436, %v412, 0
        %v465 = vsel %vm436, %v413, 0
        %v468 = vsel %vm436, %v414, 0
        %v471 = vsel %vm436, %v415, 0
        %v474 = vsel %vm436, %v416, 0
        %v477 = vsel %vm436, %v417, 0
        %v480 = vsel %vm436, %v418, 0
        %v483 = vsel %vm436, %v419, 0
        %v486 = vsel %vm436, %v420, 0
        %v489 = vsel %vm436, %v421, 0
        %v492 = vsel %vm436, %v422, 0
        %v495 = vsel %vm436, %v423, 0
        %v498 = vsel %vm436, %v424, 0
        %v501 = vsel %vm436, %v425, 0
        %v504 = vsel %vm436, %v426, 0
        %v507 = vsel %vm436, %v427, 0
        %v510 = vsel %vm436, %v428, 0
        %v513 = vsel %vm436, %v429, 0
        %v516 = vsel %vm436, %v430, 0
        %v519 = vsel %vm436, %v431, 0
        %v522 = vsel %vm436, %v432, 0
        %v525 = vsel %vm436, %v433, 0
        %v528 = vsel %vm436, %v434, 0
        %v531 = vsel %vm436, %v435, 0
        %vm533 = vcmask 1041408
        %v535 = vsel %vm533, %v268, 0
        %537 = vmatprep.subr.bf16.mxu0 0
        %538 = vmatpush1.bf16.msra.mxu0 %v535
        %539 = vmatprep.subr.bf16.mxu0 0
        %540 = vmatpush1.bf16.msra.mxu0 0
        %541 = vmatprep.subr.bf16.mxu0 0
        %542 = vmatpush1.bf16.msra.mxu0 0
        %543 = vmatprep.subr.bf16.mxu0 0
        %544 = vmatpush1.bf16.msra.mxu0 0
        %545 = vmatprep.subr.bf16.mxu0 0
        %546 = vmatpush1.bf16.msra.mxu0 0
        %547 = vmatprep.subr.bf16.mxu0 0
        %548 = vmatpush1.bf16.msra.mxu0 0
        %549 = vmatprep.subr.bf16.mxu0 0
        %550 = vmatpush1.bf16.msra.mxu0 0
        %551 = vmatprep.subr.bf16.mxu0 0
        %552 = vmatpush1.bf16.msra.mxu0 0
        %553 = vmatprep.subr.bf16.mxu0 0
        %554 = vmatpush1.bf16.msra.mxu0 0
        %555 = vmatprep.subr.bf16.mxu0 0
        %556 = vmatpush1.bf16.msra.mxu0 0
        %557 = vmatprep.subr.bf16.mxu0 0
        %558 = vmatpush1.bf16.msra.mxu0 0
        %559 = vmatprep.subr.bf16.mxu0 0
        %560 = vmatpush1.bf16.msra.mxu0 0
        %561 = vmatprep.subr.bf16.mxu0 0
        %562 = vmatpush1.bf16.msra.mxu0 0
        %563 = vmatprep.subr.bf16.mxu0 0
        %564 = vmatpush1.bf16.msra.mxu0 0
        %565 = vmatprep.subr.bf16.mxu0 0
        %566 = vmatpush1.bf16.msra.mxu0 0
        %567 = vmatprep.subr.bf16.mxu0 0
        %568 = vmatpush1.bf16.msra.mxu0 0
        %569 = vmatprep.mubr.bf16.mxu0 0
        %570 = vmatmul.mubr.bf16.gmra.mrb[0].mxu0 %v438
        %v571 = vpop.f32.mrb[0].mxu0
        %v572 = vadd.f32 %v274, %v571
        %v573 = vpop.f32.mrb[0].mxu0
        %v574 = vpop.f32.mrb[0].mxu0
        %v575 = vadd.f32 %v274, %v574
        %v576 = vpop.f32.mrb[0].mxu0
        %577 = vmatprep.mubr.bf16.mxu0 0
        %578 = vmatmul.mubr.bf16.gmra.mrb[0].mxu0 %v441
        %v579 = vpop.f32.mrb[0].mxu0
        %v580 = vadd.f32 %v274, %v579
        %v581 = vpop.f32.mrb[0].mxu0
        %v582 = vpop.f32.mrb[0].mxu0
        %v583 = vadd.f32 %v274, %v582
        %v584 = vpop.f32.mrb[0].mxu0
        %585 = vmatprep.mubr.bf16.mxu0 0
        %586 = vmatmul.mubr.bf16.gmra.mrb[0].mxu0 %v444
        %v587 = vpop.f32.mrb[0].mxu0
        %v588 = vadd.f32 %v274, %v587
        %v589 = vpop.f32.mrb[0].mxu0
        %v590 = vpop.f32.mrb[0].mxu0
        %v591 = vadd.f32 %v274, %v590
        %v592 = vpop.f32.mrb[0].mxu0
        %593 = vmatprep.mubr.bf16.mxu0 0
        %594 = vmatmul.mubr.bf16.gmra.mrb[0].mxu0 %v447
        %v595 = vpop.f32.mrb[0].mxu0
        %v596 = vadd.f32 %v274, %v595
        %v597 = vpop.f32.mrb[0].mxu0
        %v598 = vpop.f32.mrb[0].mxu0
        %v599 = vadd.f32 %v274, %v598
        %v600 = vpop.f32.mrb[0].mxu0
        %601 = vmatprep.mubr.bf16.mxu0 0
        %602 = vmatmul.mubr.bf16.gmra.mrb[0].mxu0 %v450
        %v603 = vpop.f32.mrb[0].mxu0
        %v604 = vadd.f32 %v274, %v603
        %v605 = vpop.f32.mrb[0].mxu0
        %v606 = vpop.f32.mrb[0].mxu0
        %v607 = vadd.f32 %v274, %v606
        %v608 = vpop.f32.mrb[0].mxu0
        %609 = vmatprep.mubr.bf16.mxu0 0
        %610 = vmatmul.mubr.bf16.gmra.mrb[0].mxu0 %v453
        %v611 = vpop.f32.mrb[0].mxu0
        %v612 = vadd.f32 %v274, %v611
        %v613 = vpop.f32.mrb[0].mxu0
        %v614 = vpop.f32.mrb[0].mxu0
        %v615 = vadd.f32 %v274, %v614
        %v616 = vpop.f32.mrb[0].mxu0
        %617 = vmatprep.mubr.bf16.mxu0 0
        %618 = vmatmul.mubr.bf16.gmra.mrb[0].mxu0 %v456
        %v619 = vpop.f32.mrb[0].mxu0
        %v620 = vadd.f32 %v274, %v619
        %v621 = vpop.f32.mrb[0].mxu0
        %v622 = vpop.f32.mrb[0].mxu0
        %v623 = vadd.f32 %v274, %v622
        %v624 = vpop.f32.mrb[0].mxu0
        %625 = vmatprep.mubr.bf16.mxu0 0
        %626 = vmatmul.mubr.bf16.gmra.mrb[0].mxu0 %v459
        %v627 = vpop.f32.mrb[0].mxu0
        %v628 = vadd.f32 %v274, %v627
        %v629 = vpop.f32.mrb[0].mxu0
        %v630 = vpop.f32.mrb[0].mxu0
        %v631 = vadd.f32 %v274, %v630
        %v632 = vpop.f32.mrb[0].mxu0
        %633 = vmatprep.mubr.bf16.mxu0 0
        %634 = vmatmul.mubr.bf16.gmra.mrb[0].mxu0 %v462
        %v635 = vpop.f32.mrb[0].mxu0
        %v636 = vadd.f32 %v274, %v635
        %v637 = vpop.f32.mrb[0].mxu0
        %v638 = vpop.f32.mrb[0].mxu0
        %v639 = vadd.f32 %v274, %v638
        %v640 = vpop.f32.mrb[0].mxu0
        %641 = vmatprep.mubr.bf16.mxu0 0
        %642 = vmatmul.mubr.bf16.gmra.mrb[0].mxu0 %v465
        %v643 = vpop.f32.mrb[0].mxu0
        %v644 = vadd.f32 %v274, %v643
        %v645 = vpop.f32.mrb[0].mxu0
        %v646 = vpop.f32.mrb[0].mxu0
        %v647 = vadd.f32 %v274, %v646
        %v648 = vpop.f32.mrb[0].mxu0
        %649 = vmatprep.mubr.bf16.mxu0 0
        %650 = vmatmul.mubr.bf16.gmra.mrb[0].mxu0 %v468
        %v651 = vpop.f32.mrb[0].mxu0
        %v652 = vadd.f32 %v274, %v651
        %v653 = vpop.f32.mrb[0].mxu0
        %v654 = vpop.f32.mrb[0].mxu0
        %v655 = vadd.f32 %v274, %v654
        %v656 = vpop.f32.mrb[0].mxu0
        %657 = vmatprep.mubr.bf16.mxu0 0
        %658 = vmatmul.mubr.bf16.gmra.mrb[0].mxu0 %v471
        %v659 = vpop.f32.mrb[0].mxu0
        %v660 = vadd.f32 %v274, %v659
        %v661 = vpop.f32.mrb[0].mxu0
        %v662 = vpop.f32.mrb[0].mxu0
        %v663 = vadd.f32 %v274, %v662
        %v664 = vpop.f32.mrb[0].mxu0
        %665 = vmatprep.mubr.bf16.mxu0 0
        %666 = vmatmul.mubr.bf16.gmra.mrb[0].mxu0 %v474
        %v667 = vpop.f32.mrb[0].mxu0
        %v668 = vadd.f32 %v274, %v667
        %v669 = vpop.f32.mrb[0].mxu0
        %v670 = vpop.f32.mrb[0].mxu0
        %v671 = vadd.f32 %v274, %v670
        %v672 = vpop.f32.mrb[0].mxu0
        %673 = vmatprep.mubr.bf16.mxu0 0
        %674 = vmatmul.mubr.bf16.gmra.mrb[0].mxu0 %v477
        %v675 = vpop.f32.mrb[0].mxu0
        %v676 = vadd.f32 %v274, %v675
        %v677 = vpop.f32.mrb[0].mxu0
        %v678 = vpop.f32.mrb[0].mxu0
        %v679 = vadd.f32 %v274, %v678
        %v680 = vpop.f32.mrb[0].mxu0
        %681 = vmatprep.mubr.bf16.mxu0 0
        %682 = vmatmul.mubr.bf16.gmra.mrb[0].mxu0 %v480
        %v683 = vpop.f32.mrb[0].mxu0
        %v684 = vadd.f32 %v274, %v683
        %v685 = vpop.f32.mrb[0].mxu0
        %v686 = vpop.f32.mrb[0].mxu0
        %v687 = vadd.f32 %v274, %v686
        %v688 = vpop.f32.mrb[0].mxu0
        %689 = vmatprep.mubr.bf16.mxu0 0
        %690 = vmatmul.mubr.bf16.gmra.mrb[0].mxu0 %v483
        %v691 = vpop.f32.mrb[0].mxu0
        %v692 = vadd.f32 %v274, %v691
        %v693 = vpop.f32.mrb[0].mxu0
        %v694 = vpop.f32.mrb[0].mxu0
        %v695 = vadd.f32 %v274, %v694
        %v696 = vpop.f32.mrb[0].mxu0
        %697 = vmatprep.mubr.bf16.mxu0 0
        %698 = vmatmul.mubr.bf16.gmra.mrb[0].mxu0 %v486
        %v699 = vpop.f32.mrb[0].mxu0
        %v700 = vadd.f32 %v274, %v699
        %v701 = vpop.f32.mrb[0].mxu0
        %v702 = vpop.f32.mrb[0].mxu0
        %v703 = vadd.f32 %v274, %v702
        %v704 = vpop.f32.mrb[0].mxu0
        %705 = vmatprep.mubr.bf16.mxu0 0
        %706 = vmatmul.mubr.bf16.gmra.mrb[0].mxu0 %v489
        %v707 = vpop.f32.mrb[0].mxu0
        %v708 = vadd.f32 %v274, %v707
        %v709 = vpop.f32.mrb[0].mxu0
        %v710 = vpop.f32.mrb[0].mxu0
        %v711 = vadd.f32 %v274, %v710
        %v712 = vpop.f32.mrb[0].mxu0
        %713 = vmatprep.mubr.bf16.mxu0 0
        %714 = vmatmul.mubr.bf16.gmra.mrb[0].mxu0 %v492
        %v715 = vpop.f32.mrb[0].mxu0
        %v716 = vadd.f32 %v274, %v715
        %v717 = vpop.f32.mrb[0].mxu0
        %v718 = vpop.f32.mrb[0].mxu0
        %v719 = vadd.f32 %v274, %v718
        %v720 = vpop.f32.mrb[0].mxu0
        %721 = vmatprep.mubr.bf16.mxu0 0
        %722 = vmatmul.mubr.bf16.gmra.mrb[0].mxu0 %v495
        %v723 = vpop.f32.mrb[0].mxu0
        %v724 = vadd.f32 %v274, %v723
        %v725 = vpop.f32.mrb[0].mxu0
        %v726 = vpop.f32.mrb[0].mxu0
        %v727 = vadd.f32 %v274, %v726
        %v728 = vpop.f32.mrb[0].mxu0
        %729 = vmatprep.mubr.bf16.mxu0 0
        %730 = vmatmul.mubr.bf16.gmra.mrb[0].mxu0 %v498
        %v731 = vpop.f32.mrb[0].mxu0
        %v732 = vadd.f32 %v274, %v731
        %v733 = vpop.f32.mrb[0].mxu0
        %v734 = vpop.f32.mrb[0].mxu0
        %v735 = vadd.f32 %v274, %v734
        %v736 = vpop.f32.mrb[0].mxu0
        %737 = vmatprep.mubr.bf16.mxu0 0
        %738 = vmatmul.mubr.bf16.gmra.mrb[0].mxu0 %v501
        %v739 = vpop.f32.mrb[0].mxu0
        %v740 = vadd.f32 %v274, %v739
        %v741 = vpop.f32.mrb[0].mxu0
        %v742 = vpop.f32.mrb[0].mxu0
        %v743 = vadd.f32 %v274, %v742
        %v744 = vpop.f32.mrb[0].mxu0
        %745 = vmatprep.mubr.bf16.mxu0 0
        %746 = vmatmul.mubr.bf16.gmra.mrb[0].mxu0 %v504
        %v747 = vpop.f32.mrb[0].mxu0
        %v748 = vadd.f32 %v274, %v747
        %v749 = vpop.f32.mrb[0].mxu0
        %v750 = vpop.f32.mrb[0].mxu0
        %v751 = vadd.f32 %v274, %v750
        %v752 = vpop.f32.mrb[0].mxu0
        %753 = vmatprep.mubr.bf16.mxu0 0
        %754 = vmatmul.mubr.bf16.gmra.mrb[0].mxu0 %v507
        %v755 = vpop.f32.mrb[0].mxu0
        %v756 = vadd.f32 %v274, %v755
        %v757 = vpop.f32.mrb[0].mxu0
        %v758 = vpop.f32.mrb[0].mxu0
        %v759 = vadd.f32 %v274, %v758
        %v760 = vpop.f32.mrb[0].mxu0
        %761 = vmatprep.mubr.bf16.mxu0 0
        %762 = vmatmul.mubr.bf16.gmra.mrb[0].mxu0 %v510
        %v763 = vpop.f32.mrb[0].mxu0
        %v764 = vadd.f32 %v274, %v763
        %v765 = vpop.f32.mrb[0].mxu0
        %v766 = vpop.f32.mrb[0].mxu0
        %v767 = vadd.f32 %v274, %v766
        %v768 = vpop.f32.mrb[0].mxu0
        %769 = vmatprep.mubr.bf16.mxu0 0
        %770 = vmatmul.mubr.bf16.gmra.mrb[0].mxu0 %v513
        %v771 = vpop.f32.mrb[0].mxu0
        %v772 = vadd.f32 %v274, %v771
        %v773 = vpop.f32.mrb[0].mxu0
        %v774 = vpop.f32.mrb[0].mxu0
        %v775 = vadd.f32 %v274, %v774
        %v776 = vpop.f32.mrb[0].mxu0
        %777 = vmatprep.mubr.bf16.mxu0 0
        %778 = vmatmul.mubr.bf16.gmra.mrb[0].mxu0 %v516
        %v779 = vpop.f32.mrb[0].mxu0
        %v780 = vadd.f32 %v274, %v779
        %v781 = vpop.f32.mrb[0].mxu0
        %v782 = vpop.f32.mrb[0].mxu0
        %v783 = vadd.f32 %v274, %v782
        %v784 = vpop.f32.mrb[0].mxu0
        %785 = vmatprep.mubr.bf16.mxu0 0
        %786 = vmatmul.mubr.bf16.gmra.mrb[0].mxu0 %v519
        %v787 = vpop.f32.mrb[0].mxu0
        %v788 = vadd.f32 %v274, %v787
        %v789 = vpop.f32.mrb[0].mxu0
        %v790 = vpop.f32.mrb[0].mxu0
        %v791 = vadd.f32 %v274, %v790
        %v792 = vpop.f32.mrb[0].mxu0
        %793 = vmatprep.mubr.bf16.mxu0 0
        %794 = vmatmul.mubr.bf16.gmra.mrb[0].mxu0 %v522
        %v795 = vpop.f32.mrb[0].mxu0
        %v796 = vadd.f32 %v274, %v795
        %v797 = vpop.f32.mrb[0].mxu0
        %v798 = vpop.f32.mrb[0].mxu0
        %v799 = vadd.f32 %v274, %v798
        %v800 = vpop.f32.mrb[0].mxu0
        %801 = vmatprep.mubr.bf16.mxu0 0
        %802 = vmatmul.mubr.bf16.gmra.mrb[0].mxu0 %v525
        %v803 = vpop.f32.mrb[0].mxu0
        %v804 = vadd.f32 %v274, %v803
        %v805 = vpop.f32.mrb[0].mxu0
        %v806 = vpop.f32.mrb[0].mxu0
        %v807 = vadd.f32 %v274, %v806
        %v808 = vpop.f32.mrb[0].mxu0
        %809 = vmatprep.mubr.bf16.mxu0 0
        %810 = vmatmul.mubr.bf16.gmra.mrb[0].mxu0 %v528
        %v811 = vpop.f32.mrb[0].mxu0
        %v812 = vadd.f32 %v274, %v811
        %v813 = vpop.f32.mrb[0].mxu0
        %v814 = vpop.f32.mrb[0].mxu0
        %v815 = vadd.f32 %v274, %v814
        %v816 = vpop.f32.mrb[0].mxu0
        %817 = vmatprep.mubr.bf16.mxu0 0
        %818 = vmatmul.mubr.bf16.gmra.mrb[0].mxu0 %v531
        %v819 = vpop.f32.mrb[0].mxu0
        %v820 = vadd.f32 %v274, %v819
        %v821 = vpop.f32.mrb[0].mxu0
        %v822 = vpop.f32.mrb[0].mxu0
        %v823 = vadd.f32 %v274, %v822
        %v824 = vpop.f32.mrb[0].mxu0
        %825 = vdwg.mxu0
        %v826 = vsub.f32 0.0, %v572
        %v827 = vsub.f32 0.0, %v575
        %v828 = vsub.f32 0.0, %v580
        %v829 = vsub.f32 0.0, %v583
        %v830 = vsub.f32 0.0, %v588
        %v831 = vsub.f32 0.0, %v591
        %v832 = vsub.f32 0.0, %v596
        %v833 = vsub.f32 0.0, %v599
        %v834 = vsub.f32 0.0, %v604
        %v835 = vsub.f32 0.0, %v607
        %v836 = vsub.f32 0.0, %v612
        %v837 = vsub.f32 0.0, %v615
        %v838 = vsub.f32 0.0, %v620
        %v839 = vsub.f32 0.0, %v623
        %v840 = vsub.f32 0.0, %v628
        %v841 = vsub.f32 0.0, %v631
        %v842 = vsub.f32 0.0, %v636
        %v843 = vsub.f32 0.0, %v639
        %v844 = vsub.f32 0.0, %v644
        %v845 = vsub.f32 0.0, %v647
        %v846 = vsub.f32 0.0, %v652
        %v847 = vsub.f32 0.0, %v655
        %v848 = vsub.f32 0.0, %v660
        %v849 = vsub.f32 0.0, %v663
        %v850 = vsub.f32 0.0, %v668
        %v851 = vsub.f32 0.0, %v671
        %v852 = vsub.f32 0.0, %v676
        %v853 = vsub.f32 0.0, %v679
        %v854 = vsub.f32 0.0, %v684
        %v855 = vsub.f32 0.0, %v687
        %v856 = vsub.f32 0.0, %v692
        %v857 = vsub.f32 0.0, %v695
        %v858 = vsub.f32 0.0, %v700
        %v859 = vsub.f32 0.0, %v703
        %v860 = vsub.f32 0.0, %v708
        %v861 = vsub.f32 0.0, %v711
        %v862 = vsub.f32 0.0, %v716
        %v863 = vsub.f32 0.0, %v719
        %v864 = vsub.f32 0.0, %v724
        %v865 = vsub.f32 0.0, %v727
        %v866 = vsub.f32 0.0, %v732
        %v867 = vsub.f32 0.0, %v735
        %v868 = vsub.f32 0.0, %v740
        %v869 = vsub.f32 0.0, %v743
        %v870 = vsub.f32 0.0, %v748
        %v871 = vsub.f32 0.0, %v751
        %v872 = vsub.f32 0.0, %v756
        %v873 = vsub.f32 0.0, %v759
        %v874 = vsub.f32 0.0, %v764
        %v875 = vsub.f32 0.0, %v767
        %v876 = vsub.f32 0.0, %v772
        %v877 = vsub.f32 0.0, %v775
        %v878 = vsub.f32 0.0, %v780
        %v879 = vsub.f32 0.0, %v783
        %v880 = vsub.f32 0.0, %v788
        %v881 = vsub.f32 0.0, %v791
        %v882 = vsub.f32 0.0, %v796
        %v883 = vsub.f32 0.0, %v799
        %v884 = vsub.f32 0.0, %v804
        %v885 = vsub.f32 0.0, %v807
        %v886 = vsub.f32 0.0, %v812
        %v887 = vsub.f32 0.0, %v815
        %v888 = vsub.f32 0.0, %v820
        %v889 = vsub.f32 0.0, %v823
        %v890 = vmul.f32 %v826, 1.442695
        %v891 = vpow.pop %v890
        %v892 = vmul.f32 %v827, 1.442695
        %v893 = vpow.pop %v892
        %v894 = vmul.f32 %v828, 1.442695
        %v895 = vpow.pop %v894
        %v896 = vmul.f32 %v829, 1.442695
        %v897 = vpow.pop %v896
        %v898 = vmul.f32 %v830, 1.442695
        %v899 = vpow.pop %v898
        %v900 = vmul.f32 %v831, 1.442695
        %v901 = vpow.pop %v900
        %v902 = vmul.f32 %v832, 1.442695
        %v903 = vpow.pop %v902
        %v904 = vmul.f32 %v833, 1.442695
        %v905 = vpow.pop %v904
        %v906 = vmul.f32 %v834, 1.442695
        %v907 = vpow.pop %v906
        %v908 = vmul.f32 %v835, 1.442695
        %v909 = vpow.pop %v908
        %v910 = vmul.f32 %v836, 1.442695
        %v911 = vpow.pop %v910
        %v912 = vmul.f32 %v837, 1.442695
        %v913 = vpow.pop %v912
        %v914 = vmul.f32 %v838, 1.442695
        %v915 = vpow.pop %v914
        %v916 = vmul.f32 %v839, 1.442695
        %v917 = vpow.pop %v916
        %v918 = vmul.f32 %v840, 1.442695
        %v919 = vpow.pop %v918
        %v920 = vmul.f32 %v841, 1.442695
        %v921 = vpow.pop %v920
        %v922 = vmul.f32 %v842, 1.442695
        %v923 = vpow.pop %v922
        %v924 = vmul.f32 %v843, 1.442695
        %v925 = vpow.pop %v924
        %v926 = vmul.f32 %v844, 1.442695
        %v927 = vpow.pop %v926
        %v928 = vmul.f32 %v845, 1.442695
        %v929 = vpow.pop %v928
        %v930 = vmul.f32 %v846, 1.442695
        %v931 = vpow.pop %v930
        %v932 = vmul.f32 %v847, 1.442695
        %v933 = vpow.pop %v932
        %v934 = vmul.f32 %v848, 1.442695
        %v935 = vpow.pop %v934
        %v936 = vmul.f32 %v849, 1.442695
        %v937 = vpow.pop %v936
        %v938 = vmul.f32 %v850, 1.442695
        %v939 = vpow.pop %v938
        %v940 = vmul.f32 %v851, 1.442695
        %v941 = vpow.pop %v940
        %v942 = vmul.f32 %v852, 1.442695
        %v943 = vpow.pop %v942
        %v944 = vmul.f32 %v853, 1.442695
        %v945 = vpow.pop %v944
        %v946 = vmul.f32 %v854, 1.442695
        %v947 = vpow.pop %v946
        %v948 = vmul.f32 %v855, 1.442695
        %v949 = vpow.pop %v948
        %v950 = vmul.f32 %v856, 1.442695
        %v951 = vpow.pop %v950
        %v952 = vmul.f32 %v857, 1.442695
        %v953 = vpow.pop %v952
        %v954 = vmul.f32 %v858, 1.442695
        %v955 = vpow.pop %v954
        %v956 = vmul.f32 %v859, 1.442695
        %v957 = vpow.pop %v956
        %v958 = vmul.f32 %v860, 1.442695
        %v959 = vpow.pop %v958
        %v960 = vmul.f32 %v861, 1.442695
        %v961 = vpow.pop %v960
        %v962 = vmul.f32 %v862, 1.442695
        %v963 = vpow.pop %v962
        %v964 = vmul.f32 %v863, 1.442695
        %v965 = vpow.pop %v964
        %v966 = vmul.f32 %v864, 1.442695
        %v967 = vpow.pop %v966
        %v968 = vmul.f32 %v865, 1.442695
        %v969 = vpow.pop %v968
        %v970 = vmul.f32 %v866, 1.442695
        %v971 = vpow.pop %v970
        %v972 = vmul.f32 %v867, 1.442695
        %v973 = vpow.pop %v972
        %v974 = vmul.f32 %v868, 1.442695
        %v975 = vpow.pop %v974
        %v976 = vmul.f32 %v869, 1.442695
        %v977 = vpow.pop %v976
        %v978 = vmul.f32 %v870, 1.442695
        %v979 = vpow.pop %v978
        %v980 = vmul.f32 %v871, 1.442695
        %v981 = vpow.pop %v980
        %v982 = vmul.f32 %v872, 1.442695
        %v983 = vpow.pop %v982
        %v984 = vmul.f32 %v873, 1.442695
        %v985 = vpow.pop %v984
        %v986 = vmul.f32 %v874, 1.442695
        %v987 = vpow.pop %v986
        %v988 = vmul.f32 %v875, 1.442695
        %v989 = vpow.pop %v988
        %v990 = vmul.f32 %v876, 1.442695
        %v991 = vpow.pop %v990
        %v992 = vmul.f32 %v877, 1.442695
        %v993 = vpow.pop %v992
        %v994 = vmul.f32 %v878, 1.442695
        %v995 = vpow.pop %v994
        %v996 = vmul.f32 %v879, 1.442695
        %v997 = vpow.pop %v996
        %v998 = vmul.f32 %v880, 1.442695
        %v999 = vpow.pop %v998
        %v1000 = vmul.f32 %v881, 1.442695
        %v1001 = vpow.pop %v1000
        %v1002 = vmul.f32 %v882, 1.442695
        %v1003 = vpow.pop %v1002
        %v1004 = vmul.f32 %v883, 1.442695
        %v1005 = vpow.pop %v1004
        %v1006 = vmul.f32 %v884, 1.442695
        %v1007 = vpow.pop %v1006
        %v1008 = vmul.f32 %v885, 1.442695
        %v1009 = vpow.pop %v1008
        %v1010 = vmul.f32 %v886, 1.442695
        %v1011 = vpow.pop %v1010
        %v1012 = vmul.f32 %v887, 1.442695
        %v1013 = vpow.pop %v1012
        %v1014 = vmul.f32 %v888, 1.442695
        %v1015 = vpow.pop %v1014
        %v1016 = vmul.f32 %v889, 1.442695
        %v1017 = vpow.pop %v1016
        %v1018 = vadd.f32 %v891, 1.0
        %v1019 = vadd.f32 %v893, 1.0
        %v1020 = vadd.f32 %v895, 1.0
        %v1021 = vadd.f32 %v897, 1.0
        %v1022 = vadd.f32 %v899, 1.0
        %v1023 = vadd.f32 %v901, 1.0
        %v1024 = vadd.f32 %v903, 1.0
        %v1025 = vadd.f32 %v905, 1.0
        %v1026 = vadd.f32 %v907, 1.0
        %v1027 = vadd.f32 %v909, 1.0
        %v1028 = vadd.f32 %v911, 1.0
        %v1029 = vadd.f32 %v913, 1.0
        %v1030 = vadd.f32 %v915, 1.0
        %v1031 = vadd.f32 %v917, 1.0
        %v1032 = vadd.f32 %v919, 1.0
        %v1033 = vadd.f32 %v921, 1.0
        %v1034 = vadd.f32 %v923, 1.0
        %v1035 = vadd.f32 %v925, 1.0
        %v1036 = vadd.f32 %v927, 1.0
        %v1037 = vadd.f32 %v929, 1.0
        %v1038 = vadd.f32 %v931, 1.0
        %v1039 = vadd.f32 %v933, 1.0
        %v1040 = vadd.f32 %v935, 1.0
        %v1041 = vadd.f32 %v937, 1.0
        %v1042 = vadd.f32 %v939, 1.0
        %v1043 = vadd.f32 %v941, 1.0
        %v1044 = vadd.f32 %v943, 1.0
        %v1045 = vadd.f32 %v945, 1.0
        %v1046 = vadd.f32 %v947, 1.0
        %v1047 = vadd.f32 %v949, 1.0
        %v1048 = vadd.f32 %v951, 1.0
        %v1049 = vadd.f32 %v953, 1.0
        %v1050 = vadd.f32 %v955, 1.0
        %v1051 = vadd.f32 %v957, 1.0
        %v1052 = vadd.f32 %v959, 1.0
        %v1053 = vadd.f32 %v961, 1.0
        %v1054 = vadd.f32 %v963, 1.0
        %v1055 = vadd.f32 %v965, 1.0
        %v1056 = vadd.f32 %v967, 1.0
        %v1057 = vadd.f32 %v969, 1.0
        %v1058 = vadd.f32 %v971, 1.0
        %v1059 = vadd.f32 %v973, 1.0
        %v1060 = vadd.f32 %v975, 1.0
        %v1061 = vadd.f32 %v977, 1.0
        %v1062 = vadd.f32 %v979, 1.0
        %v1063 = vadd.f32 %v981, 1.0
        %v1064 = vadd.f32 %v983, 1.0
        %v1065 = vadd.f32 %v985, 1.0
        %v1066 = vadd.f32 %v987, 1.0
        %v1067 = vadd.f32 %v989, 1.0
        %v1068 = vadd.f32 %v991, 1.0
        %v1069 = vadd.f32 %v993, 1.0
        %v1070 = vadd.f32 %v995, 1.0
        %v1071 = vadd.f32 %v997, 1.0
        %v1072 = vadd.f32 %v999, 1.0
        %v1073 = vadd.f32 %v1001, 1.0
        %v1074 = vadd.f32 %v1003, 1.0
        %v1075 = vadd.f32 %v1005, 1.0
        %v1076 = vadd.f32 %v1007, 1.0
        %v1077 = vadd.f32 %v1009, 1.0
        %v1078 = vadd.f32 %v1011, 1.0
        %v1079 = vadd.f32 %v1013, 1.0
        %v1080 = vadd.f32 %v1015, 1.0
        %v1081 = vadd.f32 %v1017, 1.0
        %v1082 = vrcp.pop %v1018
        %v1083 = vrcp.pop %v1019
        %v1084 = vrcp.pop %v1020
        %v1085 = vrcp.pop %v1021
        %v1086 = vrcp.pop %v1022
        %v1087 = vrcp.pop %v1023
        %v1088 = vrcp.pop %v1024
        %v1089 = vrcp.pop %v1025
        %v1090 = vrcp.pop %v1026
        %v1091 = vrcp.pop %v1027
        %v1092 = vrcp.pop %v1028
        %v1093 = vrcp.pop %v1029
        %v1094 = vrcp.pop %v1030
        %v1095 = vrcp.pop %v1031
        %v1096 = vrcp.pop %v1032
        %v1097 = vrcp.pop %v1033
        %v1098 = vrcp.pop %v1034
        %v1099 = vrcp.pop %v1035
        %v1100 = vrcp.pop %v1036
        %v1101 = vrcp.pop %v1037
        %v1102 = vrcp.pop %v1038
        %v1103 = vrcp.pop %v1039
        %v1104 = vrcp.pop %v1040
        %v1105 = vrcp.pop %v1041
        %v1106 = vrcp.pop %v1042
        %v1107 = vrcp.pop %v1043
        %v1108 = vrcp.pop %v1044
        %v1109 = vrcp.pop %v1045
        %v1110 = vrcp.pop %v1046
        %v1111 = vrcp.pop %v1047
        %v1112 = vrcp.pop %v1048
        %v1113 = vrcp.pop %v1049
        %v1114 = vrcp.pop %v1050
        %v1115 = vrcp.pop %v1051
        %v1116 = vrcp.pop %v1052
        %v1117 = vrcp.pop %v1053
        %v1118 = vrcp.pop %v1054
        %v1119 = vrcp.pop %v1055
        %v1120 = vrcp.pop %v1056
        %v1121 = vrcp.pop %v1057
        %v1122 = vrcp.pop %v1058
        %v1123 = vrcp.pop %v1059
        %v1124 = vrcp.pop %v1060
        %v1125 = vrcp.pop %v1061
        %v1126 = vrcp.pop %v1062
        %v1127 = vrcp.pop %v1063
        %v1128 = vrcp.pop %v1064
        %v1129 = vrcp.pop %v1065
        %v1130 = vrcp.pop %v1066
        %v1131 = vrcp.pop %v1067
        %v1132 = vrcp.pop %v1068
        %v1133 = vrcp.pop %v1069
        %v1134 = vrcp.pop %v1070
        %v1135 = vrcp.pop %v1071
        %v1136 = vrcp.pop %v1072
        %v1137 = vrcp.pop %v1073
        %v1138 = vrcp.pop %v1074
        %v1139 = vrcp.pop %v1075
        %v1140 = vrcp.pop %v1076
        %v1141 = vrcp.pop %v1077
        %v1142 = vrcp.pop %v1078
        %v1143 = vrcp.pop %v1079
        %v1144 = vrcp.pop %v1080
        %v1145 = vrcp.pop %v1081
        %v1146 = vmul.f32 %v572, %v1082
        %v1147 = vmul.f32 %v575, %v1083
        %v1148 = vmul.f32 %v580, %v1084
        %v1149 = vmul.f32 %v583, %v1085
        %v1150 = vmul.f32 %v588, %v1086
        %v1151 = vmul.f32 %v591, %v1087
        %v1152 = vmul.f32 %v596, %v1088
        %v1153 = vmul.f32 %v599, %v1089
        %v1154 = vmul.f32 %v604, %v1090
        %v1155 = vmul.f32 %v607, %v1091
        %v1156 = vmul.f32 %v612, %v1092
        %v1157 = vmul.f32 %v615, %v1093
        %v1158 = vmul.f32 %v620, %v1094
        %v1159 = vmul.f32 %v623, %v1095
        %v1160 = vmul.f32 %v628, %v1096
        %v1161 = vmul.f32 %v631, %v1097
        %v1162 = vmul.f32 %v636, %v1098
        %v1163 = vmul.f32 %v639, %v1099
        %v1164 = vmul.f32 %v644, %v1100
        %v1165 = vmul.f32 %v647, %v1101
        %v1166 = vmul.f32 %v652, %v1102
        %v1167 = vmul.f32 %v655, %v1103
        %v1168 = vmul.f32 %v660, %v1104
        %v1169 = vmul.f32 %v663, %v1105
        %v1170 = vmul.f32 %v668, %v1106
        %v1171 = vmul.f32 %v671, %v1107
        %v1172 = vmul.f32 %v676, %v1108
        %v1173 = vmul.f32 %v679, %v1109
        %v1174 = vmul.f32 %v684, %v1110
        %v1175 = vmul.f32 %v687, %v1111
        %v1176 = vmul.f32 %v692, %v1112
        %v1177 = vmul.f32 %v695, %v1113
        %v1178 = vmul.f32 %v700, %v1114
        %v1179 = vmul.f32 %v703, %v1115
        %v1180 = vmul.f32 %v708, %v1116
        %v1181 = vmul.f32 %v711, %v1117
        %v1182 = vmul.f32 %v716, %v1118
        %v1183 = vmul.f32 %v719, %v1119
        %v1184 = vmul.f32 %v724, %v1120
        %v1185 = vmul.f32 %v727, %v1121
        %v1186 = vmul.f32 %v732, %v1122
        %v1187 = vmul.f32 %v735, %v1123
        %v1188 = vmul.f32 %v740, %v1124
        %v1189 = vmul.f32 %v743, %v1125
        %v1190 = vmul.f32 %v748, %v1126
        %v1191 = vmul.f32 %v751, %v1127
        %v1192 = vmul.f32 %v756, %v1128
        %v1193 = vmul.f32 %v759, %v1129
        %v1194 = vmul.f32 %v764, %v1130
        %v1195 = vmul.f32 %v767, %v1131
        %v1196 = vmul.f32 %v772, %v1132
        %v1197 = vmul.f32 %v775, %v1133
        %v1198 = vmul.f32 %v780, %v1134
        %v1199 = vmul.f32 %v783, %v1135
        %v1200 = vmul.f32 %v788, %v1136
        %v1201 = vmul.f32 %v791, %v1137
        %v1202 = vmul.f32 %v796, %v1138
        %v1203 = vmul.f32 %v799, %v1139
        %v1204 = vmul.f32 %v804, %v1140
        %v1205 = vmul.f32 %v807, %v1141
        %v1206 = vmul.f32 %v812, %v1142
        %v1207 = vmul.f32 %v815, %v1143
        %v1208 = vmul.f32 %v820, %v1144
        %v1209 = vmul.f32 %v823, %v1145
        %1210 = vst [vmem:[%s191] sm:$0xff] %v1146
        %1211 = vst [vmem:[%s191 + $0x8] sm:$0xff] %v1147
        %1212 = vst [vmem:[%s191 + $0x10] sm:$0xff] %v1148
        %1213 = vst [vmem:[%s191 + $0x18] sm:$0xff] %v1149
        %1214 = vst [vmem:[%s191 + $0x20] sm:$0xff] %v1150
        %1215 = vst [vmem:[%s191 + $0x28] sm:$0xff] %v1151
        %1216 = vst [vmem:[%s191 + $0x30] sm:$0xff] %v1152
        %1217 = vst [vmem:[%s191 + $0x38] sm:$0xff] %v1153
        %1218 = vst [vmem:[%s191 + $0x40] sm:$0xff] %v1154
        %1219 = vst [vmem:[%s191 + $0x48] sm:$0xff] %v1155
        %1220 = vst [vmem:[%s191 + $0x50] sm:$0xff] %v1156
        %1221 = vst [vmem:[%s191 + $0x58] sm:$0xff] %v1157
        %1222 = vst [vmem:[%s191 + $0x60] sm:$0xff] %v1158
        %1223 = vst [vmem:[%s191 + $0x68] sm:$0xff] %v1159
        %1224 = vst [vmem:[%s191 + $0x70] sm:$0xff] %v1160
        %1225 = vst [vmem:[%s191 + $0x78] sm:$0xff] %v1161
        %1226 = vst [vmem:[%s191 + $0x80] sm:$0xff] %v1162
        %1227 = vst [vmem:[%s191 + $0x88] sm:$0xff] %v1163
        %1228 = vst [vmem:[%s191 + $0x90] sm:$0xff] %v1164
        %1229 = vst [vmem:[%s191 + $0x98] sm:$0xff] %v1165
        %1230 = vst [vmem:[%s191 + $0xa0] sm:$0xff] %v1166
        %1231 = vst [vmem:[%s191 + $0xa8] sm:$0xff] %v1167
        %1232 = vst [vmem:[%s191 + $0xb0] sm:$0xff] %v1168
        %1233 = vst [vmem:[%s191 + $0xb8] sm:$0xff] %v1169
        %1234 = vst [vmem:[%s191 + $0xc0] sm:$0xff] %v1170
        %1235 = vst [vmem:[%s191 + $0xc8] sm:$0xff] %v1171
        %1236 = vst [vmem:[%s191 + $0xd0] sm:$0xff] %v1172
        %1237 = vst [vmem:[%s191 + $0xd8] sm:$0xff] %v1173
        %1238 = vst [vmem:[%s191 + $0xe0] sm:$0xff] %v1174
        %1239 = vst [vmem:[%s191 + $0xe8] sm:$0xff] %v1175
        %1240 = vst [vmem:[%s191 + $0xf0] sm:$0xff] %v1176
        %1241 = vst [vmem:[%s191 + $0xf8] sm:$0xff] %v1177
        %1242 = vst [vmem:[%s191 + $0x100] sm:$0xff] %v1178
        %1243 = vst [vmem:[%s191 + $0x108] sm:$0xff] %v1179
        %1244 = vst [vmem:[%s191 + $0x110] sm:$0xff] %v1180
        %1245 = vst [vmem:[%s191 + $0x118] sm:$0xff] %v1181
        %1246 = vst [vmem:[%s191 + $0x120] sm:$0xff] %v1182
        %1247 = vst [vmem:[%s191 + $0x128] sm:$0xff] %v1183
        %1248 = vst [vmem:[%s191 + $0x130] sm:$0xff] %v1184
        %1249 = vst [vmem:[%s191 + $0x138] sm:$0xff] %v1185
        %1250 = vst [vmem:[%s191 + $0x140] sm:$0xff] %v1186
        %1251 = vst [vmem:[%s191 + $0x148] sm:$0xff] %v1187
        %1252 = vst [vmem:[%s191 + $0x150] sm:$0xff] %v1188
        %1253 = vst [vmem:[%s191 + $0x158] sm:$0xff] %v1189
        %1254 = vst [vmem:[%s191 + $0x160] sm:$0xff] %v1190
        %1255 = vst [vmem:[%s191 + $0x168] sm:$0xff] %v1191
        %1256 = vst [vmem:[%s191 + $0x170] sm:$0xff] %v1192
        %1257 = vst [vmem:[%s191 + $0x178] sm:$0xff] %v1193
        %1258 = vst [vmem:[%s191 + $0x180] sm:$0xff] %v1194
        %1259 = vst [vmem:[%s191 + $0x188] sm:$0xff] %v1195
        %1260 = vst [vmem:[%s191 + $0x190] sm:$0xff] %v1196
        %1261 = vst [vmem:[%s191 + $0x198] sm:$0xff] %v1197
        %1262 = vst [vmem:[%s191 + $0x1a0] sm:$0xff] %v1198
        %1263 = vst [vmem:[%s191 + $0x1a8] sm:$0xff] %v1199
        %1264 = vst [vmem:[%s191 + $0x1b0] sm:$0xff] %v1200
        %1265 = vst [vmem:[%s191 + $0x1b8] sm:$0xff] %v1201
        %1266 = vst [vmem:[%s191 + $0x1c0] sm:$0xff] %v1202
        %1267 = vst [vmem:[%s191 + $0x1c8] sm:$0xff] %v1203
        %1268 = vst [vmem:[%s191 + $0x1d0] sm:$0xff] %v1204
        %1269 = vst [vmem:[%s191 + $0x1d8] sm:$0xff] %v1205
        %1270 = vst [vmem:[%s191 + $0x1e0] sm:$0xff] %v1206
        %1271 = vst [vmem:[%s191 + $0x1e8] sm:$0xff] %v1207
        %1272 = vst [vmem:[%s191 + $0x1f0] sm:$0xff] %v1208
        %1273 = vst [vmem:[%s191 + $0x1f8] sm:$0xff] %v1209
        %s1274 = sand.u32 %s112, 1
        %s1275 = scalar_lea.sflag [#allocation3], %s1274
        %s1276 = sand.u32 %s112, 1
        %s1277 = smul.addr %s1276, 512
        %s1278 = scalar_lea.vmem [#allocation2], %s1277
        // Predicated region
        $region33: #{tpu_custom_call.1} parent=31 // pred_check
          %p1279 = pneg %p122
        $region34: #{tpu_custom_call.1} parent=31 // pred_check_branch
          %1281 = sbr.rel (%p1279) target = $region36
        $region35: #{tpu_custom_call.1} parent=31 // pred_region
          #allocation5 [shape = 'u32[6]{0}', space=smem, size = 0x18, scoped, tag = 'DMA stride descriptor']
          %s1282 = smul.u32 32, %s21
          %s1284 = ssub.s32 8192, 8192
          %1285 = vsyncadd %s1275, %s1284
          %s1286 = smul.addr %s22, 2
          %s1287 = smul.addr %s1282, 4
          %s1288 = sadd.s32 %s1286, %s1287
          %s1289 = smul.addr %s1288, 128
          %s1290 = scalar_lea.hbm %s3, %s1289
          %s1292 = sshll.u32 1, 14
          %s1293 = sxor.u32 4294967295, %s1292
          %s1296 = sshll.u32 7, 18
          %s1297 = sxor.u32 4294967295, %s1296
          %s1298 = sand.u32 0, %s1297
          %s1300 = sor.u32 %s1298, 0
          %s1302 = sshll.u32 3, 24
          %s1303 = sxor.u32 4294967295, %s1302
          %s1304 = sand.u32 %s1300, %s1303
          %s1306 = sor.u32 %s1304, 0
          %s1307 = sshll.u32 %s1278, 4
          %s1308 = int_to_ptr.vmem [resolvable:$true] %s1307
          %1314 = sst [smem:[#allocation5]] 256
          %s1315 = scalar_lea.smem [#allocation5], 1
          %1316 = sst [smem:[%s1315]] 512
          %s1317 = scalar_lea.smem [#allocation5], 2
          %1318 = sst [smem:[%s1317]] 2
          %s1319 = scalar_lea.smem [#allocation5], 3
          %1320 = sst [smem:[%s1319]] 128
          %s1321 = scalar_lea.smem [#allocation5], 4
          %1322 = sst [smem:[%s1321]] 128
          %s1323 = scalar_lea.smem [#allocation5], 5
          %1324 = sst [smem:[%s1323]] 8
          %1326 = dma.general %s1308, 8192, %s1290, %s1275, [#allocation4], [#allocation5], %s1306, 0
        $region36: #{tpu_custom_call.1} parent=31 // pred_fallthru
          _
      $region32: #{tpu_custom_call.1} parent=5 // pred_fallthru
        _
      %p1327 = scmp.le.s32.totalorder 2, %s12
      // Predicated region
      $region37: #{tpu_custom_call.1} parent=5 // pred_check
        %p1328 = pneg %p1327
      $region38: #{tpu_custom_call.1} parent=5 // pred_check_branch
        %1330 = sbr.rel (%p1328) target = $region40
      $region39: #{tpu_custom_call.1} parent=5 // pred_region
        %s1331 = ssub.s32 %s12, 2
        // Predicated region
        $region41: #{tpu_custom_call.1} parent=39 // pred_check
          %p1332 = pneg %p128
        $region42: #{tpu_custom_call.1} parent=39 // pred_check_branch
          %1334 = sbr.rel (%p1332) target = $region44
        $region43: #{tpu_custom_call.1} parent=39 // pred_region
          %s1335 = sand.u32 %s113, 1
          %s1336 = scalar_lea.sflag [#allocation3], %s1335
          %s1337 = sand.u32 %s113, 1
          %s1338 = smul.addr %s1337, 512
          %s1339 = scalar_lea.vmem [#allocation2], %s1338
          %1340 = dma.done %s1336, 8192
        $region44: #{tpu_custom_call.1} parent=39 // pred_fallthru
          _
      $region40: #{tpu_custom_call.1} parent=5 // pred_fallthru
        _
    $region6: #{tpu_custom_call.1} parent=1 // loop_footer
      %s16 = sadd.s32 1, %s12
    $region7: #{tpu_custom_call.1} parent=1 // loop_footer_branch
      %11 = sbr.rel target = $region3
    $region8: #{tpu_custom_call.1} parent=1 // loop_exit
      _
    %1341 = vsyncpa [#allocation3], 1
    %s1342 = scalar_lea.sflag [#allocation3], 1
    %1343 = vsyncpa %s1342, 1

</llo_original>
